<compile_context>
chip_gen: v7x
topology: tpu7x:2x2x1
jax: 0.10.0
libtpu: 0.0.40
codegen_flags: <defaults>
</compile_context>

<pallas_src>
import functools

import jax
import jax.numpy as jnp
from jax import lax
from jax.experimental import pallas as pl
from jax.experimental.pallas import tpu as pltpu


def _round_up(x, m):
    return (x + m - 1) // m * m


# ---------------------------------------------------------------------------
# Kernel bodies
# ---------------------------------------------------------------------------
def _bt_score_matrix_kernel(ii_ref, jj_ref, kk_ref, s_ref, o_ref):
    """Small-M path: s_ref is (Ma, Mp) with rows [0:Mp] = (u @ v^T)^T and
    row Mp = b^T (bias folded in); remaining rows zero."""
    Mp = s_ref.shape[1]

    ii = ii_ref[...]                       # (1, bm) int32
    jj = jj_ref[...]
    kk = kk_ref[...]

    # (Mp, 1) iota broadcast inside the compares -> no (Mp, bm) int32 temp.
    model_ids = lax.broadcasted_iota(jnp.int32, (Mp, 1), 0)
    oh_i = (model_ids == ii).astype(jnp.float32)                       # (Mp, bm)
    oh_jk = ((model_ids == jj).astype(jnp.float32)
             - (model_ids == kk).astype(jnp.float32))                  # (Mp, bm)

    # t[:, n] = [ S[i_n, :], b[i_n], 0... ]  -- single MXU matmul.
    t = jnp.dot(s_ref[...], oh_i, preferred_element_type=jnp.float32)  # (Ma, bm)

    # score_j - score_k = sum_m oh_jk[m] * S[i, m];  bias is row Mp of t.
    logits = jnp.sum(oh_jk * t[:Mp, :], axis=0, keepdims=True)         # (1, bm)
    logits = logits + t[Mp:Mp + 1, :]

    o_ref[...] = jax.nn.sigmoid(logits)


def _bt_table_kernel(ii_ref, jj_ref, kk_ref, ut_ref, vt_ref, o_ref, *, bias_row):
    """General path: ut_ref is (da, Mp) with rows [0:d] = u^T and
    row `bias_row` = b^T; vt_ref is (da, Mp) with rows [0:d] = v^T, rest zero."""
    Mp = ut_ref.shape[1]

    ii = ii_ref[...]
    jj = jj_ref[...]
    kk = kk_ref[...]

    model_ids = lax.broadcasted_iota(jnp.int32, (Mp, 1), 0)
    oh_i = (model_ids == ii).astype(jnp.float32)                       # (Mp, bm)
    oh_jk = ((model_ids == jj).astype(jnp.float32)
             - (model_ids == kk).astype(jnp.float32))                  # (Mp, bm)

    u_cols = jnp.dot(ut_ref[...], oh_i, preferred_element_type=jnp.float32)
    diff_cols = jnp.dot(vt_ref[...], oh_jk, preferred_element_type=jnp.float32)

    # Rows >= d of diff_cols are zero, so the bias row never pollutes the dot.
    logits = jnp.sum(u_cols * diff_cols, axis=0, keepdims=True)        # (1, bm)
    logits = logits + u_cols[bias_row:bias_row + 1, :]                 # + b_i

    o_ref[...] = jax.nn.sigmoid(logits)


# ---------------------------------------------------------------------------
# Wrapper
# ---------------------------------------------------------------------------
def _choose_bm(B, block_b):
    bm = min(block_b, _round_up(B, 128))
    # For large batches keep at least ~4 grid tiles so the "parallel" axis can
    # shard across TensorCores (v7x megacore) and the DMA pipeline stays busy.
    if _round_up(B, 128) >= 4 * 1024:
        min_tiles = 4
        bm = min(bm, max(1024, _round_up((B + min_tiles - 1) // min_tiles, 128)))
    return bm


@functools.partial(jax.jit, static_argnames=("block_b",))
def vector_bt_bias_forward(params, i_idx, j_idx, k_idx, *, block_b=8192):
    """JAX/Pallas equivalent of VectorBT_bias.forward."""
    u_w = params["u"].astype(jnp.float32)
    v_w = params["v"].astype(jnp.float32)
    b_w = params["b"].astype(jnp.float32)
    num_models, d = u_w.shape
    B = i_idx.shape[0]

    # --- batch tiling (lane axis) ---------------------------------------
    bm = _choose_bm(B, block_b)
    Bp = _round_up(B, bm)
    grid = (Bp // bm,)

    def pad_idx(idx):
        idx = idx.astype(jnp.int32).reshape(1, B)
        return jnp.pad(idx, ((0, 0), (0, Bp - B)))   # pad with valid index 0

    ii = pad_idx(i_idx)
    jj = pad_idx(j_idx)
    kk = pad_idx(k_idx)

    # --- model-table prep (stays resident in VMEM) -----------------------
    Mp = _round_up(num_models, 8)        # keep small: VPU one-hot cost ~ Mp
    idx_spec = pl.BlockSpec((1, bm), lambda g: (0, g))
    out_spec = pl.BlockSpec((1, bm), lambda g: (0, g))
    compiler_params = pltpu.CompilerParams(
        dimension_semantics=("parallel",),
        vmem_limit_bytes=32 * 1024 * 1024,
    )

    use_score_matrix = num_models <= 2 * d

    if use_score_matrix:
        # Precompute S = u @ v^T once; fold bias in as an extra row of S^T.
        S = u_w @ v_w.T                                            # (M, M)
        Ma = _round_up(Mp + 1, 8)
        s_aug = jnp.zeros((Ma, Mp), jnp.float32)
        s_aug = s_aug.at[:num_models, :num_models].set(S.T)
        s_aug = s_aug.at[Mp, :num_models].set(b_w[:, 0])           # bias row
        table_spec = pl.BlockSpec((Ma, Mp), lambda g: (0, 0))

        out = pl.pallas_call(
            _bt_score_matrix_kernel,
            out_shape=jax.ShapeDtypeStruct((1, Bp), jnp.float32),
            grid_spec=pltpu.PrefetchScalarGridSpec(
                num_scalar_prefetch=0,
                grid=grid,
                in_specs=[idx_spec, idx_spec, idx_spec, table_spec],
                out_specs=out_spec,
            ),
            compiler_params=compiler_params,
        )(ii, jj, kk, s_aug)
    else:
        # General path: u/v tables resident, bias folded into the u table.
        dp = _round_up(d, 8)          # sublane-aligned bias row
        da = dp + 8
        ut = jnp.zeros((da, Mp), jnp.float32)
        ut = ut.at[:d, :num_models].set(u_w.T)
        ut = ut.at[dp, :num_models].set(b_w[:, 0])                 # bias row
        vt = jnp.zeros((da, Mp), jnp.float32)
        vt = vt.at[:d, :num_models].set(v_w.T)
        table_spec = pl.BlockSpec((da, Mp), lambda g: (0, 0))
        # TODO(synk): if num_models ever outgrows VMEM, switch the tables to
        # pl.Element-indexed blocks driven by scalar-prefetched indices.

        out = pl.pallas_call(
            functools.partial(_bt_table_kernel, bias_row=dp),
            out_shape=jax.ShapeDtypeStruct((1, Bp), jnp.float32),
            grid_spec=pltpu.PrefetchScalarGridSpec(
                num_scalar_prefetch=0,
                grid=grid,
                in_specs=[idx_spec, idx_spec, idx_spec, table_spec, table_spec],
                out_specs=out_spec,
            ),
            compiler_params=compiler_params,
        )(ii, jj, kk, ut, vt)

    return out[0, :B]   # (B,), matches torch.sigmoid(... + b_i.squeeze(-1))


def init_params(key, num_models, d):
    """Deterministic init matching nn.init.normal_(std=0.1)."""
    ku, kv, kb = jax.random.split(key, 3)
    return {
        "u": 0.1 * jax.random.normal(ku, (num_models, d), jnp.float32),
        "v": 0.1 * jax.random.normal(kv, (num_models, d), jnp.float32),
        "b": 0.1 * jax.random.normal(kb, (num_models, 1), jnp.float32),
    }


if __name__ == "__main__":
    num_models, d, B = 10, 32, 16

    key = jax.random.PRNGKey(0)
    kp, ki, kj, kk = jax.random.split(key, 4)

    params = init_params(kp, num_models, d)
    i_idx = jax.random.randint(ki, (B,), 0, num_models)
    j_idx = jax.random.randint(kj, (B,), 0, num_models)
    k_idx = jax.random.randint(kk, (B,), 0, num_models)

    out = vector_bt_bias_forward(params, i_idx, j_idx, k_idx)
    out = jax.block_until_ready(out)

    # Pure-JAX reference (same semantics as the PyTorch forward).
    u_i = params["u"][i_idx]
    v_j = params["v"][j_idx]
    v_k = params["v"][k_idx]
    b_i = params["b"][i_idx][:, 0]
    ref = jax.nn.sigmoid(jnp.sum(u_i * v_j, -1) - jnp.sum(u_i * v_k, -1) + b_i)
    assert out.shape == (B,)
    assert jnp.allclose(out, ref, atol=1e-5), (out, ref)

    print("KERNEL_OK")
</pallas_src>

<mosaic_0001>
module attributes {stable_mosaic.version = 11 : i64} {
  func.func @_bt_score_matrix_kernel(%arg0: i32, %arg1: memref<1x128xi32, #tpu.memory_space<vmem>>, %arg2: memref<1x128xi32, #tpu.memory_space<vmem>>, %arg3: memref<1x128xi32, #tpu.memory_space<vmem>>, %arg4: memref<24x16xf32, #tpu.memory_space<vmem>>, %arg5: memref<1x128xf32, #tpu.memory_space<vmem>>) attributes {dimension_semantics = [#tpu.dimension_semantics<parallel>], iteration_bounds = array<i64: 1>, scalar_prefetch = 0 : i64, scratch_operands = 0 : i64, tpu.core_type = #tpu.core_type<tc>, window_params = [{transform_indices = @transform_0, window_bounds = array<i64: 1, 128>}, {transform_indices = @transform_1, window_bounds = array<i64: 1, 128>}, {transform_indices = @transform_2, window_bounds = array<i64: 1, 128>}, {pipeline_mode = #tpu.pipeline_mode<synchronous>, transform_indices = @transform_3, window_bounds = array<i64: 24, 16>}, {transform_indices = @transform_4, window_bounds = array<i64: 1, 128>}]} {
    %c0 = arith.constant 0 : index
    %c0_0 = arith.constant 0 : index
    %0 = vector.load %arg1[%c0, %c0_0] : memref<1x128xi32, #tpu.memory_space<vmem>>, vector<1x128xi32>
    %c0_1 = arith.constant 0 : index
    %c0_2 = arith.constant 0 : index
    %1 = vector.load %arg2[%c0_1, %c0_2] : memref<1x128xi32, #tpu.memory_space<vmem>>, vector<1x128xi32>
    %c0_3 = arith.constant 0 : index
    %c0_4 = arith.constant 0 : index
    %2 = vector.load %arg3[%c0_3, %c0_4] : memref<1x128xi32, #tpu.memory_space<vmem>>, vector<1x128xi32>
    %3 = tpu.iota {dimensions = array<i32: 0>} : vector<16x1xi32>
    %4 = vector.broadcast %3 : vector<16x1xi32> to vector<16x128xi32>
    %5 = vector.broadcast %0 : vector<1x128xi32> to vector<16x128xi32>
    %6 = arith.cmpi eq, %4, %5 : vector<16x128xi32>
    %7 = arith.extui %6 : vector<16x128xi1> to vector<16x128xi32>
    %8 = arith.sitofp %7 : vector<16x128xi32> to vector<16x128xf32>
    %9 = vector.broadcast %3 : vector<16x1xi32> to vector<16x128xi32>
    %10 = vector.broadcast %1 : vector<1x128xi32> to vector<16x128xi32>
    %11 = arith.cmpi eq, %9, %10 : vector<16x128xi32>
    %12 = arith.extui %11 : vector<16x128xi1> to vector<16x128xi32>
    %13 = arith.sitofp %12 : vector<16x128xi32> to vector<16x128xf32>
    %14 = vector.broadcast %3 : vector<16x1xi32> to vector<16x128xi32>
    %15 = vector.broadcast %2 : vector<1x128xi32> to vector<16x128xi32>
    %16 = arith.cmpi eq, %14, %15 : vector<16x128xi32>
    %17 = arith.extui %16 : vector<16x128xi1> to vector<16x128xi32>
    %18 = arith.sitofp %17 : vector<16x128xi32> to vector<16x128xf32>
    %19 = arith.subf %13, %18 : vector<16x128xf32>
    %c0_5 = arith.constant 0 : index
    %c0_6 = arith.constant 0 : index
    %20 = vector.load %arg4[%c0_5, %c0_6] : memref<24x16xf32, #tpu.memory_space<vmem>>, vector<24x16xf32>
    %cst = arith.constant dense<0.000000e+00> : vector<24x128xf32>
    %21 = tpu.matmul %20, %8, %cst {dimension_numbers = #tpu.dot_dimension_numbers<[1], [0], [0], [1], [0, 0, 1, 1], [], []>} : vector<24x16xf32>, vector<16x128xf32>, vector<24x128xf32> -> vector<24x128xf32>
    %22 = vector.extract_strided_slice %21 {offsets = [0, 0], sizes = [16, 128], strides = [1, 1]} : vector<24x128xf32> to vector<16x128xf32>
    %23 = arith.mulf %19, %22 : vector<16x128xf32>
    %cst_7 = arith.constant dense<0.000000e+00> : vector<128xf32>
    %24 = vector.multi_reduction <add>, %23, %cst_7 [0] : vector<16x128xf32> to vector<128xf32>
    %25 = vector.shape_cast %24 : vector<128xf32> to vector<1x128xf32>
    %26 = vector.extract_strided_slice %21 {offsets = [16, 0], sizes = [1, 128], strides = [1, 1]} : vector<24x128xf32> to vector<1x128xf32>
    %27 = arith.addf %25, %26 : vector<1x128xf32>
    %28 = arith.negf %27 : vector<1x128xf32>
    %29 = math.exp %28 : vector<1x128xf32>
    %cst_8 = arith.constant 1.000000e+00 : f32
    %30 = vector.broadcast %cst_8 : f32 to vector<1x128xf32>
    %31 = arith.addf %30, %29 : vector<1x128xf32>
    %32 = arith.divf %30, %31 : vector<1x128xf32>
    %c0_9 = arith.constant 0 : index
    %c0_10 = arith.constant 0 : index
    %33 = vector.load %arg5[%c0_9, %c0_10] : memref<1x128xf32, #tpu.memory_space<vmem>>, vector<1x128xf32>
    tpu.vector_store %arg5[%c0_9, %c0_10], %32 {strides = array<i32>} : memref<1x128xf32, #tpu.memory_space<vmem>>, vector<1x128xf32>,
    return
  }
  func.func @transform_0(%arg0: i32) -> (i32, i32) {
    %c0_i32 = arith.constant 0 : i32
    %c0_i32_0 = arith.constant 0 : i32
    return %c0_i32, %arg0 : i32, i32
  }
  func.func @transform_1(%arg0: i32) -> (i32, i32) {
    %c0_i32 = arith.constant 0 : i32
    %c0_i32_0 = arith.constant 0 : i32
    return %c0_i32, %arg0 : i32, i32
  }
  func.func @transform_2(%arg0: i32) -> (i32, i32) {
    %c0_i32 = arith.constant 0 : i32
    %c0_i32_0 = arith.constant 0 : i32
    return %c0_i32, %arg0 : i32, i32
  }
  func.func @transform_3(%arg0: i32) -> (i32, i32) {
    %c0_i32 = arith.constant 0 : i32
    %c0_i32_0 = arith.constant 0 : i32
    %c0_i32_1 = arith.constant 0 : i32
    return %c0_i32, %c0_i32_0 : i32, i32
  }
  func.func @transform_4(%arg0: i32) -> (i32, i32) {
    %c0_i32 = arith.constant 0 : i32
    %c0_i32_0 = arith.constant 0 : i32
    return %c0_i32, %arg0 : i32, i32
  }
}

</mosaic_0001>

<llo_original>
// kernel: vector_bt_bias_forward.1
$region0: #{vector_bt_bias_forward.1}
  #allocation0 [shape = 'u32[]', space=smem, size = 0x4, offset = 0x4, fixed_abs, tag = 'smem constant byte address 0x4 - core index']
  #allocation1 [shape = 'u32[144,128]{1,0:T(1,128)}', space=vmem, size = 0x12000, scoped, tag = 'internal scratch']
  %s0 = inlined_call_operand.vmem [shape: s32[1,128], index: 0, kind: input, shape index: {}]
  %s1 = inlined_call_operand.vmem [shape: s32[1,128], index: 1, kind: input, shape index: {}]
  %s2 = inlined_call_operand.vmem [shape: s32[1,128], index: 2, kind: input, shape index: {}]
  %s3 = inlined_call_operand.vmem [shape: f32[24,16], index: 3, kind: input, shape index: {}]
  %s4 = inlined_call_operand.vmem [shape: f32[1,128], index: 4, kind: output, shape index: {}]
  %s5 = sld [smem:[#allocation0]]
  $region26: #{vector_bt_bias_forward.1} parent=0
    _
  %s7 = ssub.s32 1, %s5
  %s8 = scalar_select 0, %s7, %s5
  // Predicated region
  $region2: #{vector_bt_bias_forward.1} parent=0 // pred_check
    _
  $region3: #{vector_bt_bias_forward.1} parent=0 // pred_check_branch
    %10 = sbr.rel (0) target = $region5
  $region4: #{vector_bt_bias_forward.1} parent=0 // pred_region
    _
  $region5: #{vector_bt_bias_forward.1} parent=0 // pred_fallthru
    _
  // Predicated region
  $region6: #{vector_bt_bias_forward.1} parent=0 // pred_check
    _
  $region7: #{vector_bt_bias_forward.1} parent=0 // pred_check_branch
    %12 = sbr.rel (0) target = $region9
  $region8: #{vector_bt_bias_forward.1} parent=0 // pred_region
    _
  $region9: #{vector_bt_bias_forward.1} parent=0 // pred_fallthru
    _
  // Predicated region
  $region10: #{vector_bt_bias_forward.1} parent=0 // pred_check
    _
  $region11: #{vector_bt_bias_forward.1} parent=0 // pred_check_branch
    %14 = sbr.rel (0) target = $region13
  $region12: #{vector_bt_bias_forward.1} parent=0 // pred_region
    _
  $region13: #{vector_bt_bias_forward.1} parent=0 // pred_fallthru
    _
  // Predicated region
  $region14: #{vector_bt_bias_forward.1} parent=0 // pred_check
    _
  $region15: #{vector_bt_bias_forward.1} parent=0 // pred_check_branch
    %16 = sbr.rel (0) target = $region17
  $region16: #{vector_bt_bias_forward.1} parent=0 // pred_region
    _
  $region17: #{vector_bt_bias_forward.1} parent=0 // pred_fallthru
    _
  %v17 = vld [vmem:[%s0] sm:$0x1]
  %v18 = vld [vmem:[%s1] sm:$0x1]
  %v19 = vld [vmem:[%s2] sm:$0x1]
  %v20 = vlaneseq
  %v21 = vshrl.u32 %v20, 7
  %v22 = vadd.s32 %v21, 8
  %v23 = vlaneseq
  %v24 = vshrl.u32 %v23, 7
  %v25 = vsub.s32 0, %v24
  %v26 = vrot.slane %v17, %v25
  %vm27 = vcmp.eq.s32.totalorder %v21, %v26
  %vm28 = vcmp.eq.s32.totalorder %v22, %v26
  %v29 = vsel %vm27, 1, 0
  %v30 = vsel %vm28, 1, 0
  %v31 = vcvt.s32.f32 %v29
  %v32 = vcvt.s32.f32 %v30
  %v33 = vlaneseq
  %v34 = vshrl.u32 %v33, 7
  %v35 = vsub.s32 0, %v34
  %v36 = vrot.slane %v18, %v35
  %vm37 = vcmp.eq.s32.totalorder %v21, %v36
  %vm38 = vcmp.eq.s32.totalorder %v22, %v36
  %v39 = vsel %vm37, 1, 0
  %v40 = vsel %vm38, 1, 0
  %v41 = vcvt.s32.f32 %v39
  %v42 = vcvt.s32.f32 %v40
  %v43 = vlaneseq
  %v44 = vshrl.u32 %v43, 7
  %v45 = vsub.s32 0, %v44
  %v46 = vrot.slane %v19, %v45
  %vm47 = vcmp.eq.s32.totalorder %v21, %v46
  %vm48 = vcmp.eq.s32.totalorder %v22, %v46
  %v49 = vsel %vm47, 1, 0
  %v50 = vsel %vm48, 1, 0
  %v51 = vcvt.s32.f32 %v49
  %v52 = vcvt.s32.f32 %v50
  %v53 = vsub.f32 %v41, %v51
  %v54 = vsub.f32 %v42, %v52
  %v55 = vld [vmem:[%s3] sm:$0xff]
  %v56 = vld [vmem:[%s3 + $0x8] sm:$0xff]
  %v57 = vld [vmem:[%s3 + $0x10] sm:$0xff]
  %vm58 = vcmask 130048
  %v60 = vsel %vm58, %v55, 0
  %v63 = vsel %vm58, %v56, 0
  %v66 = vsel %vm58, %v57, 0
  %68 = vmatprep.subr.mxu0 0.0
  %69 = vmatpush1.msra.mxu0 %v31
  %70 = vmatprep.subr.mxu0 0.0
  %71 = vmatpush1.msra.mxu0 %v32
  %72 = vmatprep.subr.mxu0 0.0
  %73 = vmatpush1.msra.mxu0 0.0
  %74 = vmatprep.subr.mxu0 0.0
  %75 = vmatpush1.msra.mxu0 0.0
  %76 = vmatprep.subr.mxu0 0.0
  %77 = vmatpush1.msra.mxu0 0.0
  %78 = vmatprep.subr.mxu0 0.0
  %79 = vmatpush1.msra.mxu0 0.0
  %80 = vmatprep.subr.mxu0 0.0
  %81 = vmatpush1.msra.mxu0 0.0
  %82 = vmatprep.subr.mxu0 0.0
  %83 = vmatpush1.msra.mxu0 0.0
  %84 = vmatprep.subr.mxu0 0.0
  %85 = vmatpush1.msra.mxu0 0.0
  %86 = vmatprep.subr.mxu0 0.0
  %87 = vmatpush1.msra.mxu0 0.0
  %88 = vmatprep.subr.mxu0 0.0
  %89 = vmatpush1.msra.mxu0 0.0
  %90 = vmatprep.subr.mxu0 0.0
  %91 = vmatpush1.msra.mxu0 0.0
  %92 = vmatprep.subr.mxu0 0.0
  %93 = vmatpush1.msra.mxu0 0.0
  %94 = vmatprep.subr.mxu0 0.0
  %95 = vmatpush1.msra.mxu0 0.0
  %96 = vmatprep.subr.mxu0 0.0
  %97 = vmatpush1.msra.mxu0 0.0
  %98 = vmatprep.subr.mxu0 0.0
  %99 = vmatpush1.msra.mxu0 0.0
  %100 = vmatprep.subr.mxu0 0.0
  %101 = vmatpush1.msra.mxu0 0.0
  %102 = vmatprep.subr.mxu0 0.0
  %103 = vmatpush1.msra.mxu0 0.0
  %104 = vmatprep.subr.mxu0 0.0
  %105 = vmatpush1.msra.mxu0 0.0
  %106 = vmatprep.subr.mxu0 0.0
  %107 = vmatpush1.msra.mxu0 0.0
  %108 = vmatprep.subr.mxu0 0.0
  %109 = vmatpush1.msra.mxu0 0.0
  %110 = vmatprep.subr.mxu0 0.0
  %111 = vmatpush1.msra.mxu0 0.0
  %112 = vmatprep.subr.mxu0 0.0
  %113 = vmatpush1.msra.mxu0 0.0
  %114 = vmatprep.subr.mxu0 0.0
  %115 = vmatpush1.msra.mxu0 0.0
  %116 = vmatprep.subr.mxu0 0.0
  %117 = vmatpush1.msra.mxu0 0.0
  %118 = vmatprep.subr.mxu0 0.0
  %119 = vmatpush1.msra.mxu0 0.0
  %120 = vmatprep.subr.mxu0 0.0
  %121 = vmatpush1.msra.mxu0 0.0
  %122 = vmatprep.subr.mxu0 0.0
  %123 = vmatpush1.msra.mxu0 0.0
  %124 = vmatprep.subr.mxu0 0.0
  %125 = vmatpush1.msra.mxu0 0.0
  %126 = vmatprep.subr.mxu0 0.0
  %127 = vmatpush1.msra.mxu0 0.0
  %128 = vmatprep.subr.mxu0 0.0
  %129 = vmatpush1.msra.mxu0 0.0
  %130 = vmatprep.subr.mxu0 0.0
  %131 = vmatpush1.msra.mxu0 0.0
  %132 = vmatprep.mubr.f32.mxu0 0.0
  %133 = vmatmul.mubr.f32.gmra.mrb[0].mxu0 %v60
  %v134 = vpop.f32.mrb[0].mxu0
  %v135 = vadd.f32 0.0, %v134
  %v136 = vpop.f32.mrb[0].mxu0
  %137 = vmatprep.mubr.f32.mxu0 0.0
  %138 = vmatmul.mubr.f32.gmra.mrb[0].mxu0 %v63
  %v139 = vpop.f32.mrb[0].mxu0
  %v140 = vadd.f32 0.0, %v139
  %v141 = vpop.f32.mrb[0].mxu0
  %142 = vmatprep.mubr.f32.mxu0 0.0
  %143 = vmatmul.mubr.f32.gmra.mrb[0].mxu0 %v66
  %v144 = vpop.f32.mrb[0].mxu0
  %v145 = vadd.f32 0.0, %v144
  %v146 = vpop.f32.mrb[0].mxu0
  %147 = vdwg.mxu0
  %v148 = vmul.f32 %v53, %v135
  %v149 = vmul.f32 %v54, %v140
  %v150 = vadd.f32 %v148, %v149
  %v151 = vrot.slane %v150, 4
  %v152 = vadd.f32 %v150, %v151
  %v153 = vrot.slane %v152, 2
  %v154 = vadd.f32 %v152, %v153
  %v155 = vrot.slane %v154, 1
  %v156 = vadd.f32 %v154, %v155
  %v157 = vadd.f32 %v156, %v145
  %v158 = vxor.u32 %v157, 2147483648
  %v159 = vmul.f32 %v158, 1.442695
  %v160 = vpow.pop %v159
  %v161 = vadd.f32 %v160, 1.0
  %v162 = vrcp.pop %v161
  %v163 = vmul.f32 1.0, %v162
  %164 = vst [vmem:[%s4] sm:$0x1] %v163
  // Predicated region
  $region18: #{vector_bt_bias_forward.1} parent=0 // pred_check
    _
  $region19: #{vector_bt_bias_forward.1} parent=0 // pred_check_branch
    %166 = sbr.rel (0) target = $region21
  $region20: #{vector_bt_bias_forward.1} parent=0 // pred_region
    _
  $region21: #{vector_bt_bias_forward.1} parent=0 // pred_fallthru
    _
  // Predicated region
  $region22: #{vector_bt_bias_forward.1} parent=0 // pred_check
    _
  $region23: #{vector_bt_bias_forward.1} parent=0 // pred_check_branch
    %168 = sbr.rel (0) target = $region25
  $region24: #{vector_bt_bias_forward.1} parent=0 // pred_region
    _
  $region25: #{vector_bt_bias_forward.1} parent=0 // pred_fallthru
    _

</llo_original>
